<compile_context>
chip_gen: v6e
topology: v6e:2x2x1
jax: 0.10.0
libtpu: 0.0.40
codegen_flags: <defaults>
</compile_context>

<pallas_src>
import math

import jax
import jax.numpy as jnp
from jax.experimental import pallas as pl
from jax.experimental.pallas import tpu as pltpu


def _drop_path_kernel(s_ref, x_ref, o_ref):
    # s_ref : (TB, 1, 128)  per-sample scale, broadcast over the TR rows.
    # x_ref : (TB, TR, 128) lane-dense feature tile.
    # o_ref : same shape/dtype as x_ref.
    o_ref[...] = x_ref[...] * s_ref[...]


def drop_path(x, drop_prob: float = 0.0, training: bool = False,
              scale_by_keep: bool = True, key=None):
    """Pallas implementation of the timm/ViT DropPath forward pass."""
    if drop_prob == 0.0 or not training:
        return x

    keep_prob = 1.0 - drop_prob
    if key is None:
        key = jax.random.PRNGKey(0)

    orig_shape = x.shape
    B = orig_shape[0]
    F = math.prod(orig_shape[1:])

    # Per-sample Bernoulli(keep_prob) -> scale; matches torch.bernoulli +
    # div_(keep_prob), including the keep_prob == 0 guard.
    keep = jax.random.bernoulli(key, p=keep_prob, shape=(B,))
    scale_val = (1.0 / keep_prob) if (scale_by_keep and keep_prob > 0.0) else 1.0
    scale = (keep.astype(jnp.float32) * jnp.float32(scale_val)).astype(x.dtype)
    scale3 = jnp.tile(scale.reshape(B, 1, 1), (1, 1, 128))  # lane-full, tiny

    # Lane-dense layout: (B, R, 128); pad F up to a multiple of 128 if needed
    # (rare for ViT shapes, where the embedding dim is already 128-aligned).
    x2 = x.reshape(B, F)
    F_pad = ((F + 127) // 128) * 128
    if F_pad != F:
        x2 = jnp.pad(x2, ((0, 0), (0, F_pad - F)))
    R = F_pad // 128
    x3 = x2.reshape(B, R, 128)

    # ~2 MiB tiles: tile over feature rows first, then pack multiple samples
    # per block when a single sample's features are small.
    dtype_bytes = jnp.dtype(x.dtype).itemsize
    target_rows = max(8, (2 * 1024 * 1024) // (128 * dtype_bytes))
    if R > target_rows:
        TR = (target_rows // 8) * 8   # multiple of 8 sublanes
        TB = 1
    else:
        TR = R                        # full feature extent per sample
        TB = min(B, max(1, target_rows // max(R, 1)))
    grid = (pl.cdiv(B, TB), pl.cdiv(R, TR))

    out3 = pl.pallas_call(
        _drop_path_kernel,
        out_shape=jax.ShapeDtypeStruct((B, R, 128), x.dtype),
        grid=grid,
        in_specs=[
            pl.BlockSpec((TB, 1, 128), lambda b, r: (b, 0, 0)),   # per-sample scale
            pl.BlockSpec((TB, TR, 128), lambda b, r: (b, r, 0)),  # x tile
        ],
        out_specs=pl.BlockSpec((TB, TR, 128), lambda b, r: (b, r, 0)),
        compiler_params=pltpu.CompilerParams(
            dimension_semantics=("parallel", "parallel"),
            vmem_limit_bytes=32 * 1024 * 1024,
        ),
    )(scale3, x3)

    out2 = out3.reshape(B, F_pad)
    if F_pad != F:
        out2 = out2[:, :F]
    return out2.reshape(orig_shape)


class DropPath:
    """Mirror of the PyTorch nn.Module; no parameters."""

    def __init__(self, drop_prob: float = 0.0, scale_by_keep: bool = True):
        self.drop_prob = drop_prob
        self.scale_by_keep = scale_by_keep
        self.training = True

    def __call__(self, x, key=None):
        return drop_path(x, self.drop_prob, self.training, self.scale_by_keep,
                         key=key)


if __name__ == "__main__":
    key = jax.random.PRNGKey(0)
    B, N, D = 2, 8, 32
    x = jax.random.normal(key, (B, N, D), dtype=jnp.float32)

    mod = DropPath(drop_prob=0.2, scale_by_keep=True)

    # eval mode: identity
    mod.training = False
    y_eval = jax.block_until_ready(mod(x))
    assert y_eval.shape == x.shape and y_eval.dtype == x.dtype
    assert bool(jnp.allclose(y_eval, x)), "eval mode should be identity"

    # training mode: each sample is either fully zeroed or scaled by 1/keep_prob
    mod.training = True
    y = jax.block_until_ready(mod(x, key=jax.random.PRNGKey(123)))
    assert y.shape == x.shape and y.dtype == x.dtype

    keep_prob = 1.0 - mod.drop_prob
    for b in range(B):
        row = y[b]
        dropped = bool(jnp.all(row == 0.0))
        kept = bool(jnp.allclose(row, x[b] / keep_prob, atol=1e-5, rtol=1e-5))
        assert dropped or kept, "each sample must be fully dropped or fully kept+scaled"

    # secondary check: feature size not a multiple of 128 (exercises padding path)
    x_odd = jax.random.normal(jax.random.PRNGKey(1), (2, 5, 30), dtype=jnp.float32)
    y_odd = jax.block_until_ready(
        drop_path(x_odd, 0.5, training=True, key=jax.random.PRNGKey(7)))
    assert y_odd.shape == x_odd.shape and y_odd.dtype == x_odd.dtype
    for b in range(x_odd.shape[0]):
        row = y_odd[b]
        dropped = bool(jnp.all(row == 0.0))
        kept = bool(jnp.allclose(row, x_odd[b] / 0.5, atol=1e-5, rtol=1e-5))
        assert dropped or kept, "padded-path sample must be fully dropped or kept+scaled"

    print("KERNEL_OK")
</pallas_src>

<mosaic_0001>
module attributes {stable_mosaic.version = 11 : i64} {
  func.func @_drop_path_kernel(%arg0: i32, %arg1: i32, %arg2: memref<2x1x128xf32, #tpu.memory_space<vmem>>, %arg3: memref<2x2x128xf32, #tpu.memory_space<vmem>>, %arg4: memref<2x2x128xf32, #tpu.memory_space<vmem>>) attributes {dimension_semantics = [#tpu.dimension_semantics<parallel>, #tpu.dimension_semantics<parallel>], iteration_bounds = array<i64: 1, 1>, scalar_prefetch = 0 : i64, scratch_operands = 0 : i64, tpu.core_type = #tpu.core_type<tc>, window_params = [{transform_indices = @transform_0, window_bounds = array<i64: 2, 1, 128>}, {transform_indices = @transform_1, window_bounds = array<i64: 2, 2, 128>}, {transform_indices = @transform_2, window_bounds = array<i64: 2, 2, 128>}]} {
    %c0 = arith.constant 0 : index
    %c0_0 = arith.constant 0 : index
    %c0_1 = arith.constant 0 : index
    %0 = vector.load %arg3[%c0, %c0_0, %c0_1] : memref<2x2x128xf32, #tpu.memory_space<vmem>>, vector<2x2x128xf32>
    %c0_2 = arith.constant 0 : index
    %c0_3 = arith.constant 0 : index
    %c0_4 = arith.constant 0 : index
    %1 = vector.load %arg2[%c0_2, %c0_3, %c0_4] : memref<2x1x128xf32, #tpu.memory_space<vmem>>, vector<2x1x128xf32>
    %2 = vector.broadcast %1 : vector<2x1x128xf32> to vector<2x2x128xf32>
    %3 = arith.mulf %0, %2 : vector<2x2x128xf32>
    %c0_5 = arith.constant 0 : index
    %c0_6 = arith.constant 0 : index
    %c0_7 = arith.constant 0 : index
    %4 = vector.load %arg4[%c0_5, %c0_6, %c0_7] : memref<2x2x128xf32, #tpu.memory_space<vmem>>, vector<2x2x128xf32>
    tpu.vector_store %arg4[%c0_5, %c0_6, %c0_7], %3 {strides = array<i32>} : memref<2x2x128xf32, #tpu.memory_space<vmem>>, vector<2x2x128xf32>,
    return
  }
  func.func @transform_0(%arg0: i32, %arg1: i32) -> (i32, i32, i32) {
    %c0_i32 = arith.constant 0 : i32
    %c0_i32_0 = arith.constant 0 : i32
    %c0_i32_1 = arith.constant 0 : i32
    return %arg0, %c0_i32, %c0_i32_0 : i32, i32, i32
  }
  func.func @transform_1(%arg0: i32, %arg1: i32) -> (i32, i32, i32) {
    %c0_i32 = arith.constant 0 : i32
    %c0_i32_0 = arith.constant 0 : i32
    return %arg0, %arg1, %c0_i32 : i32, i32, i32
  }
  func.func @transform_2(%arg0: i32, %arg1: i32) -> (i32, i32, i32) {
    %c0_i32 = arith.constant 0 : i32
    %c0_i32_0 = arith.constant 0 : i32
    return %arg0, %arg1, %c0_i32 : i32, i32, i32
  }
}

</mosaic_0001>

<llo_original>
// kernel: tpu_custom_call.1
$region0: #{tpu_custom_call.1}
  #allocation0 [shape = 'u32[]', space=smem, size = 0x4, offset = 0x4, fixed_abs, tag = 'smem constant byte address 0x4 - core index']
  #allocation1 [shape = 'u32[144,128]{1,0:T(1,128)}', space=vmem, size = 0x12000, scoped, tag = 'internal scratch']
  %s0 = inlined_call_operand.hbm [shape: f32[2,1,128], index: 0, kind: input, shape index: {}]
  %s1 = inlined_call_operand.hbm [shape: f32[2,2,128], index: 1, kind: input, shape index: {}]
  %s2 = inlined_call_operand.hbm [shape: f32[2,2,128], index: 2, kind: output, shape index: {}]
  %s3 = sld [smem:[#allocation0]]
  $region26: #{tpu_custom_call.1} parent=0
    _
  %s5 = ssub.s32 1, %s3
  %s6 = scalar_select 0, %s5, %s3
  $region1: #{tpu_custom_call.1} parent=0
    #allocation2 [shape = 'u8[1024]{0}', space=vmem, size = 0x400, scoped, tag = 'input window, operand 0, single buffered']
    #allocation3 [shape = 's32[1]{0}', space=sflag, size = 0x4, scoped, tag = 'scoped memory for tpu_custom_call.1']
    #allocation4 [shape = 's32[1]{0}', space=sflag, size = 0x4, scoped, tag = 'scoped memory for tpu_custom_call.1']
    #allocation5 [shape = 'u8[2048]{0}', space=vmem, size = 0x800, scoped, tag = 'input window, operand 1, single buffered']
    #allocation6 [shape = 's32[1]{0}', space=sflag, size = 0x4, scoped, tag = 'scoped memory for tpu_custom_call.1']
    #allocation7 [shape = 'u8[2048]{0}', space=vmem, size = 0x800, scoped, tag = 'output window, operand 0, single buffered']
    %7 = vsyncpa [#allocation3], 0
    %8 = vsyncpa [#allocation6], 0
    %9 = vsyncpa [#allocation4], 0
    // Predicated region
    $region2: #{tpu_custom_call.1} parent=1 // pred_check
      _
    $region3: #{tpu_custom_call.1} parent=1 // pred_check_branch
      %11 = sbr.rel (0) target = $region5
    $region4: #{tpu_custom_call.1} parent=1 // pred_region
      %s13 = ssub.s32 32, 32
      %14 = vsyncadd [#allocation3], %s13
      %s15 = sshll.u32 [#allocation2], 4
      %s16 = int_to_ptr.vmem [resolvable:$true] %s15
      %21 = dma.hbm_to_vmem [thread:$0]  %s0, 32, %s16, [#allocation3], 16, 16, 1
    $region5: #{tpu_custom_call.1} parent=1 // pred_fallthru
      _
    // Predicated region
    $region6: #{tpu_custom_call.1} parent=1 // pred_check
      _
    $region7: #{tpu_custom_call.1} parent=1 // pred_check_branch
      %23 = sbr.rel (0) target = $region9
    $region8: #{tpu_custom_call.1} parent=1 // pred_region
      %s25 = ssub.s32 64, 64
      %26 = vsyncadd [#allocation6], %s25
      %s27 = sshll.u32 [#allocation5], 4
      %s28 = int_to_ptr.vmem [resolvable:$true] %s27
      %33 = dma.hbm_to_vmem [thread:$0]  %s1, 64, %s28, [#allocation6], 32, 32, 2
    $region9: #{tpu_custom_call.1} parent=1 // pred_fallthru
      _
    // Predicated region
    $region10: #{tpu_custom_call.1} parent=1 // pred_check
      _
    $region11: #{tpu_custom_call.1} parent=1 // pred_check_branch
      %35 = sbr.rel (0) target = $region13
    $region12: #{tpu_custom_call.1} parent=1 // pred_region
      %36 = dma.done [#allocation3], 32
    $region13: #{tpu_custom_call.1} parent=1 // pred_fallthru
      _
    // Predicated region
    $region14: #{tpu_custom_call.1} parent=1 // pred_check
      _
    $region15: #{tpu_custom_call.1} parent=1 // pred_check_branch
      %38 = sbr.rel (0) target = $region17
    $region16: #{tpu_custom_call.1} parent=1 // pred_region
      %39 = dma.done [#allocation6], 64
    $region17: #{tpu_custom_call.1} parent=1 // pred_fallthru
      _
    %v40 = vld [vmem:[#allocation5] sm:$0x3]
    %v41 = vld [vmem:[#allocation5 + $0x2] sm:$0x3]
    %v42 = vld [vmem:[#allocation2] sm:$0x1]
    %v43 = vld [vmem:[#allocation2 + $0x1] sm:$0x1]
    %v46 = vlaneseq
    %v47 = vshrl.u32 %v46, 7
    %v48 = vsub.s32 0, %v47
    %v49 = vrot.slane %v42, %v48
    %v50 = vlaneseq
    %v51 = vshrl.u32 %v50, 7
    %v52 = vsub.s32 0, %v51
    %v53 = vrot.slane %v43, %v52
    %v56 = vmul.f32 %v40, %v49
    %v57 = vmul.f32 %v41, %v53
    %58 = vst [vmem:[#allocation7] sm:$0x3] %v56
    %59 = vst [vmem:[#allocation7 + $0x2] sm:$0x3] %v57
    // Predicated region
    $region18: #{tpu_custom_call.1} parent=1 // pred_check
      _
    $region19: #{tpu_custom_call.1} parent=1 // pred_check_branch
      %61 = sbr.rel (0) target = $region21
    $region20: #{tpu_custom_call.1} parent=1 // pred_region
      %s63 = ssub.s32 64, 64
      %64 = vsyncadd [#allocation4], %s63
      %s65 = sshll.u32 [#allocation7], 4
      %s66 = int_to_ptr.vmem [resolvable:$true] %s65
      %71 = dma.vmem_to_hbm [thread:$0]  %s66, 64, %s2, [#allocation4], 32, 32, 2
    $region21: #{tpu_custom_call.1} parent=1 // pred_fallthru
      _
    // Predicated region
    $region22: #{tpu_custom_call.1} parent=1 // pred_check
      _
    $region23: #{tpu_custom_call.1} parent=1 // pred_check_branch
      %73 = sbr.rel (0) target = $region25
    $region24: #{tpu_custom_call.1} parent=1 // pred_region
      %74 = dma.done [#allocation4], 64
    $region25: #{tpu_custom_call.1} parent=1 // pred_fallthru
      _
    %75 = vsyncpa [#allocation3], 1
    %76 = vsyncpa [#allocation6], 1
    %77 = vsyncpa [#allocation4], 1

</llo_original>
